<compile_context>
chip_gen: v5e
topology: v5e:2x2
jax: 0.10.0
libtpu: 0.0.40
codegen_flags: <defaults>
</compile_context>

<pallas_src>
import functools

import jax
import jax.numpy as jnp
from jax.experimental import pallas as pl
from jax.experimental.pallas import tpu as pltpu

EPS = 1e-5  # nn.LayerNorm default


def _round_up(n, m):
    return ((n + m - 1) // m) * m


def _sublane_multiple(dtype):
    itemsize = jnp.dtype(dtype).itemsize
    if itemsize >= 4:
        return 8
    if itemsize == 2:
        return 16
    return 32


def _invariant_spec(shape):
    """BlockSpec for a grid-invariant operand: constant index_map + single buffer."""
    index_map = lambda *_: (0,) * len(shape)
    try:
        return pl.BlockSpec(shape, index_map,
                            pipeline_mode=pl.Buffered(buffer_count=1))
    except TypeError:  # older jax without pipeline_mode: fall back to default
        return pl.BlockSpec(shape, index_map)


def _prenorm_linear_kernel(x_ref, gamma_ref, beta_ref, w_ref, b_ref, o_ref):
    # x_ref: (TR, D) row tile; gamma/beta/b: (1, D); w: (D, D).
    x = x_ref[...].astype(jnp.float32)

    # --- LayerNorm over the last axis (biased variance, like nn.LayerNorm).
    # Two-pass (mean, then centered variance) kept for numerical robustness;
    # the kernel is HBM-bound at D=128 so the extra VALU pass is free filler.
    mean = jnp.mean(x, axis=-1, keepdims=True)
    xc = x - mean
    var = jnp.mean(xc * xc, axis=-1, keepdims=True)
    inv = jax.lax.rsqrt(var + EPS)
    y = (xc * inv) * gamma_ref[...].astype(jnp.float32) \
        + beta_ref[...].astype(jnp.float32)

    # --- fn: Linear(D, D).  MXU operands in W's native dtype (bf16 callers
    # get native MXU throughput), f32 accumulation.
    out = jnp.dot(y.astype(w_ref.dtype), w_ref[...],
                  preferred_element_type=jnp.float32)
    out = out + b_ref[...].astype(jnp.float32)
    o_ref[...] = out.astype(o_ref.dtype)


@functools.partial(jax.jit, static_argnames=("tile_rows",))
def prenorm(x, gamma, beta, w, b, *, tile_rows=512):
    """x: (B, N, D).  Returns fn(LayerNorm(x)) with fn = Linear(D, D)."""
    B, N, D = x.shape
    rows = B * N
    x2 = x.reshape(rows, D)

    x_bytes = jnp.dtype(x.dtype).itemsize
    w_bytes = jnp.dtype(w.dtype).itemsize
    out_bytes = x_bytes
    sub = _sublane_multiple(x.dtype)

    # --- Tile selection -----------------------------------------------------
    # Target at least 2 grid steps (so v7x's 2 TensorCores both get work),
    # never exceed tile_rows, and keep the tile a multiple of the dtype's
    # sublane packing.  Tiny inputs fall back to a full-extent block.
    if rows < sub:
        tile = rows
    else:
        tile = min(tile_rows, _round_up(pl.cdiv(rows, 2), sub))
        tile = max(tile, sub)

    # VMEM budget: 2x double-buffered (x + out) tiles, single-buffered
    # invariants (W + gamma/beta/bias), plus ~2 f32 (tile, D) intermediates.
    # 40 MiB keeps headroom under v7x's 64 MiB physical VMEM.
    def vmem_est(t):
        io = 2 * t * D * (x_bytes + out_bytes)       # double-buffered x/out
        res = D * D * w_bytes + 3 * D * 4            # single-buffered invariants
        scratch = 2 * t * D * 4                      # f32 LN / matmul intermediates
        return io + res + scratch

    VMEM_BUDGET = 40 * 1024 * 1024
    while tile > sub and vmem_est(tile) > VMEM_BUDGET:
        tile = max(sub, _round_up(tile // 2, sub))

    vmem_limit = int(min(56 * 1024 * 1024,
                         max(16 * 1024 * 1024, int(vmem_est(tile) * 1.5))))

    grid = (pl.cdiv(rows, tile),)  # ragged tail block handled by Pallas masking

    gamma2 = gamma.reshape(1, D)
    beta2 = beta.reshape(1, D)
    b2 = b.reshape(1, D)

    cost = pl.CostEstimate(
        flops=2 * rows * D * D + 8 * rows * D,
        transcendentals=rows,  # one rsqrt per row
        bytes_accessed=(rows * D * (x_bytes + out_bytes)
                        + D * D * w_bytes
                        + 3 * D * 4),
    )

    out = pl.pallas_call(
        _prenorm_linear_kernel,
        out_shape=jax.ShapeDtypeStruct((rows, D), x.dtype),
        grid_spec=pltpu.PrefetchScalarGridSpec(
            num_scalar_prefetch=0,
            grid=grid,
            in_specs=[
                pl.BlockSpec((tile, D), lambda i: (i, 0)),  # x row tile
                _invariant_spec((1, D)),                    # gamma
                _invariant_spec((1, D)),                    # beta
                _invariant_spec((D, D)),                    # W
                _invariant_spec((1, D)),                    # bias
            ],
            out_specs=pl.BlockSpec((tile, D), lambda i: (i, 0)),
        ),
        compiler_params=pltpu.CompilerParams(
            dimension_semantics=("parallel",),
            vmem_limit_bytes=vmem_limit),
        cost_estimate=cost,
    )(x2, gamma2, beta2, w, b2)

    return out.reshape(B, N, D)


def prenorm_ref(x, gamma, beta, w, b):
    xf = x.astype(jnp.float32)
    mean = jnp.mean(xf, axis=-1, keepdims=True)
    var = jnp.mean((xf - mean) ** 2, axis=-1, keepdims=True)
    y = (xf - mean) * jax.lax.rsqrt(var + EPS) * gamma + beta
    return (y @ w.astype(jnp.float32) + b).astype(x.dtype)


if __name__ == "__main__":
    key = jax.random.PRNGKey(0)
    # D=128 keeps the output lane-dense (full 128-lane vregs); N=9 gives
    # rows=18, which does not divide the tile -> exercises the masked
    # ragged-tail-block path that replaced the pad/slice round-trip.
    B, N, D = 2, 9, 128
    kx, kw, kb, kg, kbeta = jax.random.split(key, 5)

    x = jax.random.normal(kx, (B, N, D), dtype=jnp.float32)
    # LayerNorm affine params (perturbed from the PyTorch default weight=1,
    # bias=0 so the broadcast path is actually exercised).
    gamma = 1.0 + 0.1 * jax.random.normal(kg, (D,), dtype=jnp.float32)
    beta = 0.1 * jax.random.normal(kbeta, (D,), dtype=jnp.float32)
    # Deterministic Linear(D, D) params for fn.  (bf16 W/x is supported and
    # recommended on v6e when numerics allow; f32 here for a tight check.)
    w = jax.random.normal(kw, (D, D), dtype=jnp.float32) / jnp.sqrt(D)
    b = jax.random.normal(kb, (D,), dtype=jnp.float32) * 0.01

    out = prenorm(x, gamma, beta, w, b)
    jax.block_until_ready(out)

    ref = prenorm_ref(x, gamma, beta, w, b)
    assert out.shape == (B, N, D)
    assert jnp.allclose(out, ref, atol=2e-4, rtol=2e-4), "mismatch vs reference"
    print("KERNEL_OK")
</pallas_src>

<mosaic_0001>
module attributes {stable_mosaic.version = 11 : i64} {
  func.func @_prenorm_linear_kernel(%arg0: i32, %arg1: memref<16x128xf32, #tpu.memory_space<vmem>>, %arg2: memref<1x128xf32, #tpu.memory_space<vmem>>, %arg3: memref<1x128xf32, #tpu.memory_space<vmem>>, %arg4: memref<128x128xf32, #tpu.memory_space<vmem>>, %arg5: memref<1x128xf32, #tpu.memory_space<vmem>>, %arg6: memref<16x128xf32, #tpu.memory_space<vmem>>) attributes {dimension_semantics = [#tpu.dimension_semantics<parallel>], iteration_bounds = array<i64: 2>, scalar_prefetch = 0 : i64, scratch_operands = 0 : i64, tpu.core_type = #tpu.core_type<tc>, window_params = [{transform_indices = @transform_0, window_bounds = array<i64: 16, 128>}, {pipeline_mode = #tpu.pipeline_mode<synchronous>, transform_indices = @transform_1, window_bounds = array<i64: 1, 128>}, {pipeline_mode = #tpu.pipeline_mode<synchronous>, transform_indices = @transform_2, window_bounds = array<i64: 1, 128>}, {pipeline_mode = #tpu.pipeline_mode<synchronous>, transform_indices = @transform_3, window_bounds = array<i64: 128, 128>}, {pipeline_mode = #tpu.pipeline_mode<synchronous>, transform_indices = @transform_4, window_bounds = array<i64: 1, 128>}, {transform_indices = @transform_5, window_bounds = array<i64: 16, 128>}]} {
    %c0 = arith.constant 0 : index
    %c0_0 = arith.constant 0 : index
    %0 = vector.load %arg1[%c0, %c0_0] : memref<16x128xf32, #tpu.memory_space<vmem>>, vector<16x128xf32>
    %cst = arith.constant dense<0.000000e+00> : vector<16xf32>
    %1 = vector.multi_reduction <add>, %0, %cst [1] : vector<16x128xf32> to vector<16xf32>
    %2 = vector.shape_cast %1 : vector<16xf32> to vector<16x1xf32>
    %cst_1 = arith.constant 1.280000e+02 : f32
    %3 = vector.broadcast %cst_1 : f32 to vector<16x1xf32>
    %4 = arith.divf %2, %3 : vector<16x1xf32>
    %5 = vector.broadcast %4 : vector<16x1xf32> to vector<16x128xf32>
    %6 = arith.subf %0, %5 : vector<16x128xf32>
    %7 = arith.mulf %6, %6 : vector<16x128xf32>
    %cst_2 = arith.constant dense<0.000000e+00> : vector<16xf32>
    %8 = vector.multi_reduction <add>, %7, %cst_2 [1] : vector<16x128xf32> to vector<16xf32>
    %9 = vector.shape_cast %8 : vector<16xf32> to vector<16x1xf32>
    %cst_3 = arith.constant 1.280000e+02 : f32
    %10 = vector.broadcast %cst_3 : f32 to vector<16x1xf32>
    %11 = arith.divf %9, %10 : vector<16x1xf32>
    %cst_4 = arith.constant 9.99999974E-6 : f32
    %12 = vector.broadcast %cst_4 : f32 to vector<16x1xf32>
    %13 = arith.addf %11, %12 : vector<16x1xf32>
    %14 = math.rsqrt %13 : vector<16x1xf32>
    %15 = vector.broadcast %14 : vector<16x1xf32> to vector<16x128xf32>
    %16 = arith.mulf %6, %15 : vector<16x128xf32>
    %c0_5 = arith.constant 0 : index
    %c0_6 = arith.constant 0 : index
    %17 = vector.load %arg2[%c0_5, %c0_6] : memref<1x128xf32, #tpu.memory_space<vmem>>, vector<1x128xf32>
    %18 = vector.broadcast %17 : vector<1x128xf32> to vector<16x128xf32>
    %19 = arith.mulf %16, %18 : vector<16x128xf32>
    %c0_7 = arith.constant 0 : index
    %c0_8 = arith.constant 0 : index
    %20 = vector.load %arg3[%c0_7, %c0_8] : memref<1x128xf32, #tpu.memory_space<vmem>>, vector<1x128xf32>
    %21 = vector.broadcast %20 : vector<1x128xf32> to vector<16x128xf32>
    %22 = arith.addf %19, %21 : vector<16x128xf32>
    %c0_9 = arith.constant 0 : index
    %c0_10 = arith.constant 0 : index
    %23 = vector.load %arg4[%c0_9, %c0_10] : memref<128x128xf32, #tpu.memory_space<vmem>>, vector<128x128xf32>
    %cst_11 = arith.constant dense<0.000000e+00> : vector<16x128xf32>
    %24 = tpu.matmul %22, %23, %cst_11 {dimension_numbers = #tpu.dot_dimension_numbers<[1], [0], [0], [1], [0, 0, 1, 1], [], []>} : vector<16x128xf32>, vector<128x128xf32>, vector<16x128xf32> -> vector<16x128xf32>
    %c0_12 = arith.constant 0 : index
    %c0_13 = arith.constant 0 : index
    %25 = vector.load %arg5[%c0_12, %c0_13] : memref<1x128xf32, #tpu.memory_space<vmem>>, vector<1x128xf32>
    %26 = vector.broadcast %25 : vector<1x128xf32> to vector<16x128xf32>
    %27 = arith.addf %24, %26 : vector<16x128xf32>
    %c0_14 = arith.constant 0 : index
    %c0_15 = arith.constant 0 : index
    %28 = vector.load %arg6[%c0_14, %c0_15] : memref<16x128xf32, #tpu.memory_space<vmem>>, vector<16x128xf32>
    tpu.vector_store %arg6[%c0_14, %c0_15], %27 {strides = array<i32>} : memref<16x128xf32, #tpu.memory_space<vmem>>, vector<16x128xf32>,
    return
  }
  func.func @transform_0(%arg0: i32) -> (i32, i32) {
    %c0_i32 = arith.constant 0 : i32
    %c0_i32_0 = arith.constant 0 : i32
    return %arg0, %c0_i32 : i32, i32
  }
  func.func @transform_1(%arg0: i32) -> (i32, i32) {
    %c0_i32 = arith.constant 0 : i32
    %c0_i32_0 = arith.constant 0 : i32
    %c0_i32_1 = arith.constant 0 : i32
    return %c0_i32, %c0_i32_0 : i32, i32
  }
  func.func @transform_2(%arg0: i32) -> (i32, i32) {
    %c0_i32 = arith.constant 0 : i32
    %c0_i32_0 = arith.constant 0 : i32
    %c0_i32_1 = arith.constant 0 : i32
    return %c0_i32, %c0_i32_0 : i32, i32
  }
  func.func @transform_3(%arg0: i32) -> (i32, i32) {
    %c0_i32 = arith.constant 0 : i32
    %c0_i32_0 = arith.constant 0 : i32
    %c0_i32_1 = arith.constant 0 : i32
    return %c0_i32, %c0_i32_0 : i32, i32
  }
  func.func @transform_4(%arg0: i32) -> (i32, i32) {
    %c0_i32 = arith.constant 0 : i32
    %c0_i32_0 = arith.constant 0 : i32
    %c0_i32_1 = arith.constant 0 : i32
    return %c0_i32, %c0_i32_0 : i32, i32
  }
  func.func @transform_5(%arg0: i32) -> (i32, i32) {
    %c0_i32 = arith.constant 0 : i32
    %c0_i32_0 = arith.constant 0 : i32
    return %arg0, %c0_i32 : i32, i32
  }
}

</mosaic_0001>

<llo_original>
// kernel: prenorm.1
$region0: #{prenorm.1}
  #allocation0 [shape = 'u32[]', space=smem, size = 0x4, offset = 0x4, fixed_abs, tag = 'smem constant byte address 0x4 - core index']
  #allocation1 [shape = 'u32[72,128]{1,0:T(1,128)}', space=vmem, size = 0x9000, scoped, tag = 'internal scratch']
  %s0 = inlined_call_operand.vmem [shape: f32[18,128], index: 0, kind: input, shape index: {}]
  %s1 = inlined_call_operand.vmem [shape: f32[1,128], index: 1, kind: input, shape index: {}]
  %s2 = inlined_call_operand.vmem [shape: f32[1,128], index: 2, kind: input, shape index: {}]
  %s3 = inlined_call_operand.hbm [shape: f32[128,128], index: 3, kind: input, shape index: {}]
  %s4 = inlined_call_operand.vmem [shape: f32[1,128], index: 4, kind: input, shape index: {}]
  %s5 = inlined_call_operand.vmem [shape: f32[18,128], index: 5, kind: output, shape index: {}]
  %s6 = sld [smem:[#allocation0]]
  $region105: #{prenorm.1} parent=0
    _
  %s8 = ssub.s32 1, %s6
  %s9 = scalar_select 0, %s8, %s6
  $region1: #{prenorm.1} parent=0
    #allocation2 [shape = 'u8[65536]{0}', space=vmem, size = 0x10000, scoped, tag = 'input window, operand 3, single buffered']
    #allocation3 [shape = 's32[2]{0}', space=sflag, size = 0x8, scoped, tag = 'scoped memory for prenorm.1']
    #allocation4 [shape = 'u8[16384]{0}', space=vmem, size = 0x4000, scoped, tag = 'output window, operand 0']
    %10 = vsyncpa [#allocation3], 0
    loop: start=0, step=1, limit=4
    $region2: #{prenorm.1} parent=1 // loop_pre_header
      _
    $region3: #{prenorm.1} parent=1 // loop_header
      %s12 = sphi 0, %s16
      %p13 = scmp.ge.s32.totalorder %s12, 4
      %s22 = sphi 0, %s24
      %s25 = sphi 0, %s22
      %s26 = sphi 0, %s25
      %s42 = sphi 0, %s26
      %s46 = sphi 0, %s46
      %s48 = sphi 0, %s46
      %s49 = sphi 0, %s48
      %s63 = sphi 0, %s49
      %s67 = sphi 0, %s67
      %s69 = sphi 0, %s67
      %s70 = sphi 0, %s69
      %s84 = sphi 0, %s70
      %s88 = sphi 0, %s88
      %s90 = sphi 0, %s88
      %s91 = sphi 0, %s90
      %s105 = sphi 0, %s91
      %s109 = sphi 0, %s109
      %s111 = sphi 0, %s109
      %s112 = sphi 0, %s111
      %s126 = sphi 0, %s112
      %s132 = sphi 0, %s134
      %s135 = sphi 0, %s132
      %s136 = sphi 0, %s135
      %s152 = sphi 0, %s136
    $region4: #{prenorm.1} parent=1 // loop_header_branch
      %15 = sbr.rel (%p13) target = $region8
    $region5: #{prenorm.1} parent=1 // loop_body
      %s17 = ssub.s32 %s12, 1
      %s18 = ssub.s32 %s12, 2
      %s19 = sadd.s32 %s12, 1
      %s20 = ssub.s32 %s12, %s19
      %p21 = scmp.eq.s32.totalorder %s20, 0
      %s23 = sadd.s32 %s22, 1
      %s24 = scalar_select %p21, %s22, %s23
      %p27 = pneg %p21
      %p28 = scmp.eq.s32.totalorder %s12, 1
      %p29 = por %p27, %p28
      %p30 = scmp.ne.s32.totalorder %s22, %s25
      %p31 = scmp.eq.s32.totalorder %s12, 0
      %p32 = por %p30, %p31
      %p33 = scmp.ne.s32.totalorder %s22, %s25
      %p34 = scmp.eq.s32.totalorder %s17, 1
      %p35 = por %p33, %p34
      %p36 = scmp.ne.s32.totalorder %s25, %s26
      %p37 = scmp.eq.s32.totalorder %s17, 0
      %p38 = por %p36, %p37
      %p39 = scmp.ne.s32.totalorder %s25, %s26
      %p40 = scmp.eq.s32.totalorder %s18, 1
      %p41 = por %p39, %p40
      %p43 = scmp.ne.s32.totalorder %s26, %s42
      %p44 = scmp.eq.s32.totalorder %s18, 0
      %p45 = por %p43, %p44
      %s47 = sadd.s32 %s46, 1
      %p50 = scmp.eq.s32.totalorder %s12, 1
      %p51 = scmp.ne.s32.totalorder %s46, %s48
      %p52 = scmp.eq.s32.totalorder %s12, 0
      %p53 = por %p51, %p52
      %p54 = scmp.ne.s32.totalorder %s46, %s48
      %p55 = scmp.eq.s32.totalorder %s17, 1
      %p56 = por %p54, %p55
      %p57 = scmp.ne.s32.totalorder %s48, %s49
      %p58 = scmp.eq.s32.totalorder %s17, 0
      %p59 = por %p57, %p58
      %p60 = scmp.ne.s32.totalorder %s48, %s49
      %p61 = scmp.eq.s32.totalorder %s18, 1
      %p62 = por %p60, %p61
      %p64 = scmp.ne.s32.totalorder %s49, %s63
      %p65 = scmp.eq.s32.totalorder %s18, 0
      %p66 = por %p64, %p65
      %s68 = sadd.s32 %s67, 1
      %p71 = scmp.eq.s32.totalorder %s12, 1
      %p72 = scmp.ne.s32.totalorder %s67, %s69
      %p73 = scmp.eq.s32.totalorder %s12, 0
      %p74 = por %p72, %p73
      %p75 = scmp.ne.s32.totalorder %s67, %s69
      %p76 = scmp.eq.s32.totalorder %s17, 1
      %p77 = por %p75, %p76
      %p78 = scmp.ne.s32.totalorder %s69, %s70
      %p79 = scmp.eq.s32.totalorder %s17, 0
      %p80 = por %p78, %p79
      %p81 = scmp.ne.s32.totalorder %s69, %s70
      %p82 = scmp.eq.s32.totalorder %s18, 1
      %p83 = por %p81, %p82
      %p85 = scmp.ne.s32.totalorder %s70, %s84
      %p86 = scmp.eq.s32.totalorder %s18, 0
      %p87 = por %p85, %p86
      %s89 = sadd.s32 %s88, 1
      %p92 = scmp.eq.s32.totalorder %s12, 1
      %p93 = scmp.ne.s32.totalorder %s88, %s90
      %p94 = scmp.eq.s32.totalorder %s12, 0
      %p95 = por %p93, %p94
      %p96 = scmp.ne.s32.totalorder %s88, %s90
      %p97 = scmp.eq.s32.totalorder %s17, 1
      %p98 = por %p96, %p97
      %p99 = scmp.ne.s32.totalorder %s90, %s91
      %p100 = scmp.eq.s32.totalorder %s17, 0
      %p101 = por %p99, %p100
      %p102 = scmp.ne.s32.totalorder %s90, %s91
      %p103 = scmp.eq.s32.totalorder %s18, 1
      %p104 = por %p102, %p103
      %p106 = scmp.ne.s32.totalorder %s91, %s105
      %p107 = scmp.eq.s32.totalorder %s18, 0
      %p108 = por %p106, %p107
      %s110 = sadd.s32 %s109, 1
      %p113 = scmp.eq.s32.totalorder %s12, 1
      %p114 = scmp.ne.s32.totalorder %s109, %s111
      %p115 = scmp.eq.s32.totalorder %s12, 0
      %p116 = por %p114, %p115
      %p117 = scmp.ne.s32.totalorder %s109, %s111
      %p118 = scmp.eq.s32.totalorder %s17, 1
      %p119 = por %p117, %p118
      %p120 = scmp.ne.s32.totalorder %s111, %s112
      %p121 = scmp.eq.s32.totalorder %s17, 0
      %p122 = por %p120, %p121
      %p123 = scmp.ne.s32.totalorder %s111, %s112
      %p124 = scmp.eq.s32.totalorder %s18, 1
      %p125 = por %p123, %p124
      %p127 = scmp.ne.s32.totalorder %s112, %s126
      %p128 = scmp.eq.s32.totalorder %s18, 0
      %p129 = por %p127, %p128
      %s130 = ssub.s32 %s12, %s19
      %p131 = scmp.eq.s32.totalorder %s130, 0
      %s133 = sadd.s32 %s132, 1
      %s134 = scalar_select %p131, %s132, %s133
      %p137 = pneg %p131
      %p138 = scmp.eq.s32.totalorder %s12, 1
      %p139 = por %p137, %p138
      %p140 = scmp.ne.s32.totalorder %s132, %s135
      %p141 = scmp.eq.s32.totalorder %s12, 0
      %p142 = por %p140, %p141
      %p143 = scmp.ne.s32.totalorder %s132, %s135
      %p144 = scmp.eq.s32.totalorder %s17, 1
      %p145 = por %p143, %p144
      %p146 = scmp.ne.s32.totalorder %s135, %s136
      %p147 = scmp.eq.s32.totalorder %s17, 0
      %p148 = por %p146, %p147
      %p149 = scmp.ne.s32.totalorder %s135, %s136
      %p150 = scmp.eq.s32.totalorder %s18, 1
      %p151 = por %p149, %p150
      %p153 = scmp.ne.s32.totalorder %s136, %s152
      %p154 = scmp.eq.s32.totalorder %s18, 0
      %p155 = por %p153, %p154
      %p156 = scmp.le.s32.totalorder 1, %s12
      %p157 = scmp.lt.s32.totalorder %s12, 3
      %p158 = pnand %p156, %p157
      %p159 = pneg %p158
      // Predicated region
      $region9: #{prenorm.1} parent=5 // pred_check
        _
      $region10: #{prenorm.1} parent=5 // pred_check_branch
        %161 = sbr.rel (%p158) target = $region12
      $region11: #{prenorm.1} parent=5 // pred_region
        %s162 = ssub.s32 %s12, 1
        // Predicated region
        $region13: #{prenorm.1} parent=11 // pred_check
          %p163 = pneg %p59
        $region14: #{prenorm.1} parent=11 // pred_check_branch
          %165 = sbr.rel (%p163) target = $region16
        $region15: #{prenorm.1} parent=11 // pred_region
          _
        $region16: #{prenorm.1} parent=11 // pred_fallthru
          _
        // Predicated region
        $region17: #{prenorm.1} parent=11 // pred_check
          %p166 = pneg %p80
        $region18: #{prenorm.1} parent=11 // pred_check_branch
          %168 = sbr.rel (%p166) target = $region20
        $region19: #{prenorm.1} parent=11 // pred_region
          _
        $region20: #{prenorm.1} parent=11 // pred_fallthru
          _
        // Predicated region
        $region21: #{prenorm.1} parent=11 // pred_check
          %p169 = pneg %p101
        $region22: #{prenorm.1} parent=11 // pred_check_branch
          %171 = sbr.rel (%p169) target = $region24
        $region23: #{prenorm.1} parent=11 // pred_region
          %173 = vsyncadd [#allocation3], 0
          %s174 = sshll.u32 %s3, 4
          %s175 = int_to_ptr.hbm [resolvable:$true] %s174
          %s176 = sshll.u32 [#allocation2], 4
          %s177 = int_to_ptr.vmem [resolvable:$true] %s176
          %182 = dma.hbm_to_vmem [thread:$0]  %s175, 2048, %s177, [#allocation3], 128, 128, 8
        $region24: #{prenorm.1} parent=11 // pred_fallthru
          _
        // Predicated region
        $region25: #{prenorm.1} parent=11 // pred_check
          %p183 = pneg %p122
        $region26: #{prenorm.1} parent=11 // pred_check_branch
          %185 = sbr.rel (%p183) target = $region28
        $region27: #{prenorm.1} parent=11 // pred_region
          _
        $region28: #{prenorm.1} parent=11 // pred_fallthru
          _
      $region12: #{prenorm.1} parent=5 // pred_fallthru
        _
      %p186 = scmp.lt.s32.totalorder %s12, 2
      // Predicated region
      $region29: #{prenorm.1} parent=5 // pred_check
        %p187 = pneg %p186
      $region30: #{prenorm.1} parent=5 // pred_check_branch
        %189 = sbr.rel (%p187) target = $region32
      $region31: #{prenorm.1} parent=5 // pred_region
        // Predicated region
        $region33: #{prenorm.1} parent=31 // pred_check
          %p190 = pneg %p32
        $region34: #{prenorm.1} parent=31 // pred_check_branch
          %192 = sbr.rel (%p190) target = $region36
        $region35: #{prenorm.1} parent=31 // pred_region
          %s193 = smul.u32 2, %s12
          %s194 = ssub.s32 3, %s193
          %p195 = scmp.lt.s32.totalorder %s194, 2
          %s196 = scalar_select %p195, %s194, 2
          %s197 = smul.u32 8, %s196
          %p198 = scmp.lt.s32.totalorder %s193, 2
          %s199 = scalar_select %p198, %s193, 2
          %s200 = smul.addr %s199, 8
          %s201 = scalar_lea.vmem %s0, %s200
          %s202 = smul.u32 2, %s12
          %s203 = ssub.s32 3, %s202
          %p204 = scmp.lt.s32.totalorder %s203, 2
          %s205 = scalar_select %p204, %s203, 2
          %s206 = smul.u32 8, %s205
        $region36: #{prenorm.1} parent=31 // pred_fallthru
          _
      $region32: #{prenorm.1} parent=5 // pred_fallthru
        _
      %p207 = scmp.le.s32.totalorder 1, %s12
      %p208 = scmp.lt.s32.totalorder %s12, 3
      %p209 = pnand %p207, %p208
      %p210 = pneg %p209
      // Predicated region
      $region37: #{prenorm.1} parent=5 // pred_check
        _
      $region38: #{prenorm.1} parent=5 // pred_check_branch
        %212 = sbr.rel (%p209) target = $region40
      $region39: #{prenorm.1} parent=5 // pred_region
        %s213 = ssub.s32 %s12, 1
        // Predicated region
        $region41: #{prenorm.1} parent=39 // pred_check
          %p214 = pneg %p101
        $region42: #{prenorm.1} parent=39 // pred_check_branch
          %216 = sbr.rel (%p214) target = $region44
        $region43: #{prenorm.1} parent=39 // pred_region
          %218 = dma.done [#allocation3], 2048
        $region44: #{prenorm.1} parent=39 // pred_fallthru
          _
        %s219 = smul.u32 2, %s17
        %s220 = ssub.s32 3, %s219
        %p221 = scmp.lt.s32.totalorder %s220, 2
        %s222 = scalar_select %p221, %s220, 2
        %s223 = smul.u32 8, %s222
        %p224 = scmp.lt.s32.totalorder %s219, 2
        %s225 = scalar_select %p224, %s219, 2
        %s226 = smul.addr %s225, 8
        %s227 = scalar_lea.vmem %s0, %s226
        %p228 = pneg %p38
        %p229 = pneg %p35
        %p230 = pneg %p59
        %p231 = pneg %p56
        %p232 = pneg %p80
        %p233 = pneg %p77
        %p234 = pneg %p101
        %p235 = pneg %p98
        %p236 = pneg %p122
        %p237 = pneg %p119
        %p238 = pneg %p148
        %p239 = pneg %p145
        %s240 = sand.u32 %s135, 1
        %s241 = sand.u32 %s135, 1
        %s242 = smul.addr %s241, 16
        %s243 = scalar_lea.vmem [#allocation4], %s242
        %s244 = smul.u32 2, %s17
        %s245 = ssub.s32 3, %s244
        %p246 = scmp.lt.s32.totalorder %s245, 2
        %s247 = scalar_select %p246, %s245, 2
        %s248 = smul.u32 8, %s247
        %p249 = scmp.lt.s32.totalorder %s244, 2
        %s250 = scalar_select %p249, %s244, 2
        %s251 = smul.addr %s250, 8
        %s252 = scalar_lea.vmem %s0, %s251
        %s253 = smul.u32 2, %s17
        %s254 = ssub.s32 3, %s253
        %p255 = scmp.lt.s32.totalorder %s254, 2
        %s256 = scalar_select %p255, %s254, 2
        %s257 = smul.u32 8, %s256
        %s258 = smul.u32 2, %s17
        %s259 = ssub.s32 3, %s258
        %p260 = scmp.lt.s32.totalorder %s259, 2
        %s261 = scalar_select %p260, %s259, 2
        %s262 = smul.u32 8, %s261
        %v263 = vld [vmem:[%s252] sm:$0xff]
        %v264 = vld [vmem:[%s252 + $0x8] sm:$0xff]
        %265 = vadd.xlane.f32.xlu0 %v263
        %v266 = vpop.xlane.xlu0 %265
        %267 = vadd.xlane.f32.xlu0 %v264
        %v268 = vpop.xlane.xlu0 %267
        %v269 = vrcp.pop 128.0
        %v270 = vmul.f32 128.0, %v269
        %v271 = vsub.f32 1.0, %v270
        %v272 = vmul.f32 %v269, %v271
        %v273 = vadd.f32 %v269, %v272
        %vm274 = vweird.f32 %v269
        %v275 = vsel %vm274, %v269, %v273
        %v276 = vmul.f32 %v266, %v275
        %v277 = vmul.f32 %v268, %v275
        %v278 = vsub.f32 %v263, %v276
        %v279 = vsub.f32 %v264, %v277
        %v280 = vmul.f32 %v278, %v278
        %v281 = vmul.f32 %v279, %v279
        %282 = vadd.xlane.f32.xlu0 %v280
        %v283 = vpop.xlane.xlu0 %282
        %284 = vadd.xlane.f32.xlu0 %v281
        %v285 = vpop.xlane.xlu0 %284
        %v286 = vmul.f32 %v283, %v275
        %v287 = vmul.f32 %v285, %v275
        %v288 = vadd.f32 %v286, 1e-05
        %v289 = vadd.f32 %v287, 1e-05
        %v290 = vrsqrt.pop %v288
        %v291 = vmul.f32 %v290, %v288
        %v292 = vmul.f32 %v291, %v290
        %v293 = vmul.f32 0.5, %v292
        %v294 = vsub.f32 1.5, %v293
        %v295 = vmul.f32 %v290, %v294
        %vm296 = vweird.f32 %v288
        %vm297 = vweird.f32 %v290
        %vm298 = vmor %vm296, %vm297
        %v299 = vsel %vm298, %v290, %v295
        %v300 = vrsqrt.pop %v289
        %v301 = vmul.f32 %v300, %v289
        %v302 = vmul.f32 %v301, %v300
        %v303 = vmul.f32 0.5, %v302
        %v304 = vsub.f32 1.5, %v303
        %v305 = vmul.f32 %v300, %v304
        %vm306 = vweird.f32 %v289
        %vm307 = vweird.f32 %v300
        %vm308 = vmor %vm306, %vm307
        %v309 = vsel %vm308, %v300, %v305
        %v310 = vmul.f32 %v278, %v299
        %v311 = vmul.f32 %v279, %v309
        %v312 = vld [vmem:[%s1] sm:$0x1]
        %v314 = vperm.slane %v312, 0
        %v316 = vmul.f32 %v310, %v314
        %v317 = vmul.f32 %v311, %v314
        %v318 = vld [vmem:[%s2] sm:$0x1]
        %v320 = vperm.slane %v318, 0
        %v322 = vadd.f32 %v316, %v320
        %v323 = vadd.f32 %v317, %v320
        %v324 = vld [vmem:[#allocation2] sm:$0xff]
        %v325 = vld [vmem:[#allocation2 + $0x8] sm:$0xff]
        %v326 = vld [vmem:[#allocation2 + $0x10] sm:$0xff]
        %v327 = vld [vmem:[#allocation2 + $0x18] sm:$0xff]
        %v328 = vld [vmem:[#allocation2 + $0x20] sm:$0xff]
        %v329 = vld [vmem:[#allocation2 + $0x28] sm:$0xff]
        %v330 = vld [vmem:[#allocation2 + $0x30] sm:$0xff]
        %v331 = vld [vmem:[#allocation2 + $0x38] sm:$0xff]
        %v332 = vld [vmem:[#allocation2 + $0x40] sm:$0xff]
        %v333 = vld [vmem:[#allocation2 + $0x48] sm:$0xff]
        %v334 = vld [vmem:[#allocation2 + $0x50] sm:$0xff]
        %v335 = vld [vmem:[#allocation2 + $0x58] sm:$0xff]
        %v336 = vld [vmem:[#allocation2 + $0x60] sm:$0xff]
        %v337 = vld [vmem:[#allocation2 + $0x68] sm:$0xff]
        %v338 = vld [vmem:[#allocation2 + $0x70] sm:$0xff]
        %v339 = vld [vmem:[#allocation2 + $0x78] sm:$0xff]
        %v340 = vld [vmem:[%s4] sm:$0x1]
        %v342 = vperm.slane %v340, 0
        %344 = vmatpush.msra.mxu0 %v339
        %345 = vmatpush.msra.mxu0 %v338
        %346 = vmatpush.msra.mxu0 %v337
        %347 = vmatpush.msra.mxu0 %v336
        %348 = vmatpush.msra.mxu0 %v335
        %349 = vmatpush.msra.mxu0 %v334
        %350 = vmatpush.msra.mxu0 %v333
        %351 = vmatpush.msra.mxu0 %v332
        %352 = vmatpush.msra.mxu0 %v331
        %353 = vmatpush.msra.mxu0 %v330
        %354 = vmatpush.msra.mxu0 %v329
        %355 = vmatpush.msra.mxu0 %v328
        %356 = vmatpush.msra.mxu0 %v327
        %357 = vmatpush.msra.mxu0 %v326
        %358 = vmatpush.msra.mxu0 %v325
        %359 = vmatpush.msra.mxu0 %v324
        %360 = vmatmul.f32.gmra.mxu0 %v322
        %v361 = vpop.f32.mrf.mxu0
        %v362 = vadd.f32 %v342, %v361
        %363 = vmatmul.f32.gmra.mxu0 %v323
        %v364 = vpop.f32.mrf.mxu0
        %v365 = vadd.f32 %v342, %v364
        %366 = vdwg.mxu0
        %367 = vst [vmem:[%s243] sm:$0xff] %v362
        %368 = vst [vmem:[%s243 + $0x8] sm:$0xff] %v365
        %s369 = sand.u32 %s135, 1
        %s370 = sand.u32 %s135, 1
        %s371 = smul.addr %s370, 16
        %s372 = scalar_lea.vmem [#allocation4], %s371
        // Predicated region
        $region45: #{prenorm.1} parent=39 // pred_check
          %p373 = pneg %p145
        $region46: #{prenorm.1} parent=39 // pred_check_branch
          %375 = sbr.rel (%p373) target = $region48
        $region47: #{prenorm.1} parent=39 // pred_region
          %s376 = smul.u32 2, %s17
          %s377 = ssub.s32 3, %s376
          %p378 = scmp.lt.s32.totalorder %s377, 2
          %s379 = scalar_select %p378, %s377, 2
          %s380 = smul.u32 8, %s379
          %p381 = scmp.ne.s32.totalorder 0, %s380
          %s382 = smul.addr %s376, 8
          %s383 = scalar_lea.vmem %s5, %s382
          // Predicated region
          $region49: #{prenorm.1} parent=47 // pred_check
            %p384 = pneg %p381
          $region50: #{prenorm.1} parent=47 // pred_check_branch
            %386 = sbr.rel (%p384) target = $region52
          $region51: #{prenorm.1} parent=47 // pred_region
            // Predicated region
            $region53: #{prenorm.1} parent=51 // pred_check
              _
            $region54: #{prenorm.1} parent=51 // pred_check_branch
              %388 = sbr.rel (0) target = $region56
            $region55: #{prenorm.1} parent=51 // pred_region
              // Predicated region
              $region75: #{prenorm.1} parent=55 // pred_check
                _
              $region76: #{prenorm.1} parent=55 // pred_check_branch
                %440 = sbr.rel (0) target = $region78
              $region77: #{prenorm.1} parent=55 // pred_region
                %s441 = sshrl.u32 %s379, 1
                // While loop
                $region79: #{prenorm.1} parent=77 // loop_pre_header
                  _
                $region80: #{prenorm.1} parent=77 // loop_header
                  %s443 = sphi 0, %s445
                  %p444 = scmp.ge.s32.totalorder %s443, %s441
                  %s448 = sphi 0, %s457
                  %s449 = sphi %s372, %s460
                  %s450 = sphi %s383, %s461
                $region81: #{prenorm.1} parent=77 // loop_header_branch
                  %447 = sbr.rel (%p444) target = $region85
                $region82: #{prenorm.1} parent=77 // loop_body
                  %v451 = vld [vmem:[%s449] sm:$0xff]
                  %452 = vst [vmem:[%s450] sm:$0xff] %v451
                  %v453 = vld [vmem:[%s449 + $0x8] sm:$0xff]
                  %454 = vst [vmem:[%s450 + $0x8] sm:$0xff] %v453
                  %s455 = sadd.s32 1, %s448
                  %p456 = scmp.ge.s32.totalorder %s455, %s441
                  %s457 = scalar_select %p456, 0, %s455
                  %s458 = smul.u32 %s457, 16
                  %s459 = smul.u32 %s457, 16
                  %s460 = scalar_lea.vmem %s372, %s458 [#allocation4]
                  %s461 = scalar_lea.vmem %s383, %s459
                $region83: #{prenorm.1} parent=77 // loop_footer
                  %s445 = sadd.s32 %s443, 1
                $region84: #{prenorm.1} parent=77 // loop_footer_branch
                  %442 = sbr.rel target = $region80
                $region85: #{prenorm.1} parent=77 // loop_exit
                  _
                %s462 = sshrl.u32 %s379, 1
                %s463 = sand.u32 %s379, 1
                %s464 = smul.u32 %s462, 2
                %s465 = smul.u32 8, %s464
                %s466 = scalar_lea.vmem %s372, %s465 [#allocation4]
                %s467 = smul.u32 8, %s464
                %s468 = scalar_lea.vmem %s383, %s467
                // While loop
                $region86: #{prenorm.1} parent=77 // loop_pre_header
                  _
                $region87: #{prenorm.1} parent=77 // loop_header
                  %s470 = sphi 0, %s472
                  %p471 = scmp.ge.s32.totalorder %s470, %s463
                  %s475 = sphi 0, %s482
                  %s476 = sphi %s466, %s485
                  %s477 = sphi %s468, %s486
                $region88: #{prenorm.1} parent=77 // loop_header_branch
                  %474 = sbr.rel (%p471) target = $region92
                $region89: #{prenorm.1} parent=77 // loop_body
                  %v478 = vld [vmem:[%s476] sm:$0xff]
                  %479 = vst [vmem:[%s477] sm:$0xff] %v478
                  %s480 = sadd.s32 1, %s475
                  %p481 = scmp.ge.s32.totalorder %s480, %s463
                  %s482 = scalar_select %p481, 0, %s480
                  %s483 = smul.u32 %s482, 8
                  %s484 = smul.u32 %s482, 8
                  %s485 = scalar_lea.vmem %s466, %s483 [#allocation4]
                  %s486 = scalar_lea.vmem %s468, %s484
                $region90: #{prenorm.1} parent=77 // loop_footer
                  %s472 = sadd.s32 %s470, 1
                $region91: #{prenorm.1} parent=77 // loop_footer_branch
                  %469 = sbr.rel target = $region87
                $region92: #{prenorm.1} parent=77 // loop_exit
                  _
              $region78: #{prenorm.1} parent=55 // pred_fallthru
                _
              // Predicated region
              $region93: #{prenorm.1} parent=55 // pred_check
                _
              $region94: #{prenorm.1} parent=55 // pred_check_branch
                %488 = sbr.rel target = $region96
              $region95: #{prenorm.1} parent=55 // pred_region
                _
              $region96: #{prenorm.1} parent=55 // pred_fallthru
                _
            $region56: #{prenorm.1} parent=51 // pred_fallthru
              _
            // Predicated region
            $region57: #{prenorm.1} parent=51 // pred_check
              _
            $region58: #{prenorm.1} parent=51 // pred_check_branch
              %390 = sbr.rel target = $region60
            $region59: #{prenorm.1} parent=51 // pred_region
              %s392 = ssub.s32 256, 1
              %s393 = sshrl.u32 %s379, 1
              // While loop
              $region61: #{prenorm.1} parent=59 // loop_pre_header
                _
              $region62: #{prenorm.1} parent=59 // loop_header
                %s395 = sphi 0, %s397
                %p396 = scmp.ge.s32.totalorder %s395, %s393
                %s400 = sphi 0, %s409
                %s401 = sphi %s372, %s412
                %s402 = sphi %s383, %s413
              $region63: #{prenorm.1} parent=59 // loop_header_branch
                %399 = sbr.rel (%p396) target = $region67
              $region64: #{prenorm.1} parent=59 // loop_body
                %v403 = vld [vmem:[%s401] sm:%s392]
                %404 = vst [vmem:[%s402] sm:%s392] %v403
                %v405 = vld [vmem:[%s401 + $0x8] sm:%s392]
                %406 = vst [vmem:[%s402 + $0x8] sm:%s392] %v405
                %s407 = sadd.s32 1, %s400
                %p408 = scmp.ge.s32.totalorder %s407, %s393
                %s409 = scalar_select %p408, 0, %s407
                %s410 = smul.u32 %s409, 16
                %s411 = smul.u32 %s409, 16
                %s412 = scalar_lea.vmem %s372, %s410 [#allocation4]
                %s413 = scalar_lea.vmem %s383, %s411
              $region65: #{prenorm.1} parent=59 // loop_footer
                %s397 = sadd.s32 %s395, 1
              $region66: #{prenorm.1} parent=59 // loop_footer_branch
                %394 = sbr.rel target = $region62
              $region67: #{prenorm.1} parent=59 // loop_exit
                _
              %s414 = sshrl.u32 %s379, 1
              %s415 = sand.u32 %s379, 1
              %s416 = smul.u32 %s414, 2
              %s417 = smul.u32 8, %s416
              %s418 = scalar_lea.vmem %s372, %s417 [#allocation4]
              %s419 = smul.u32 8, %s416
              %s420 = scalar_lea.vmem %s383, %s419
              // While loop
              $region68: #{prenorm.1} parent=59 // loop_pre_header
                _
              $region69: #{prenorm.1} parent=59 // loop_header
                %s422 = sphi 0, %s424
                %p423 = scmp.ge.s32.totalorder %s422, %s415
                %s427 = sphi 0, %s434
                %s428 = sphi %s418, %s437
                %s429 = sphi %s420, %s438
              $region70: #{prenorm.1} parent=59 // loop_header_branch
                %426 = sbr.rel (%p423) target = $region74
              $region71: #{prenorm.1} parent=59 // loop_body
                %v430 = vld [vmem:[%s428] sm:%s392]
                %431 = vst [vmem:[%s429] sm:%s392] %v430
                %s432 = sadd.s32 1, %s427
                %p433 = scmp.ge.s32.totalorder %s432, %s415
                %s434 = scalar_select %p433, 0, %s432
                %s435 = smul.u32 %s434, 8
                %s436 = smul.u32 %s434, 8
                %s437 = scalar_lea.vmem %s418, %s435 [#allocation4]
                %s438 = scalar_lea.vmem %s420, %s436
              $region72: #{prenorm.1} parent=59 // loop_footer
                %s424 = sadd.s32 %s422, 1
              $region73: #{prenorm.1} parent=59 // loop_footer_branch
                %421 = sbr.rel target = $region69
              $region74: #{prenorm.1} parent=59 // loop_exit
                _
            $region60: #{prenorm.1} parent=51 // pred_fallthru
              _
          $region52: #{prenorm.1} parent=47 // pred_fallthru
            _
          %489 = vnop
        $region48: #{prenorm.1} parent=39 // pred_fallthru
          _
      $region40: #{prenorm.1} parent=5 // pred_fallthru
        _
      %p490 = scmp.le.s32.totalorder 2, %s12
      // Predicated region
      $region97: #{prenorm.1} parent=5 // pred_check
        %p491 = pneg %p490
      $region98: #{prenorm.1} parent=5 // pred_check_branch
        %493 = sbr.rel (%p491) target = $region100
      $region99: #{prenorm.1} parent=5 // pred_region
        %s494 = ssub.s32 %s12, 2
        // Predicated region
        $region101: #{prenorm.1} parent=99 // pred_check
          %p495 = pneg %p151
        $region102: #{prenorm.1} parent=99 // pred_check_branch
          %497 = sbr.rel (%p495) target = $region104
        $region103: #{prenorm.1} parent=99 // pred_region
          %s498 = sand.u32 %s136, 1
          %s499 = sand.u32 %s136, 1
          %s500 = smul.addr %s499, 16
          %s501 = scalar_lea.vmem [#allocation4], %s500
        $region104: #{prenorm.1} parent=99 // pred_fallthru
          _
      $region100: #{prenorm.1} parent=5 // pred_fallthru
        _
    $region6: #{prenorm.1} parent=1 // loop_footer
      %s16 = sadd.s32 1, %s12
    $region7: #{prenorm.1} parent=1 // loop_footer_branch
      %11 = sbr.rel target = $region3
    $region8: #{prenorm.1} parent=1 // loop_exit
      _
    %502 = vsyncpa [#allocation3], 1
    %s503 = scalar_lea.sflag [#allocation3], 1
    %504 = vsyncpa %s503, 1

</llo_original>
